<compile_context>
chip_gen: v6e
topology: v6e:2x2x1
jax: 0.10.0
libtpu: 0.0.40
codegen_flags: <defaults>
</compile_context>

<pallas_src>
import jax
import jax.numpy as jnp
from jax.experimental import pallas as pl
from jax.experimental.pallas import tpu as pltpu

HIDDEN_SIZE = 64
OUTPUT_SIZE = 2
INPUT_4 = 32          # hidden_layer output width (nn.Linear(hidden_size, 32))

TILE_ROWS_MAX = 2048  # rows per grid step (multiple of 16)
ROW_ALIGN = 16        # satisfies (8,128) f32 and (16,128) bf16 sublane tiling


def _round_up(n, m):
    return ((n + m - 1) // m) * m


def exmlp_kernel(x_ref, w1_ref, b1_ref, wh_ref, bh_ref, w5_ref, b5_ref, o_ref):
    # layer1: x @ W1 + b1, ReLU  (MXU accumulates in f32; bias/ReLU in f32)
    h1 = jnp.dot(x_ref[...], w1_ref[...], preferred_element_type=jnp.float32)
    h1 = jnp.maximum(h1 + b1_ref[...], 0.0)
    # hidden_layer: h1 @ Wh + bh, ReLU
    h2 = jnp.dot(h1.astype(wh_ref.dtype), wh_ref[...],
                 preferred_element_type=jnp.float32)
    h2 = jnp.maximum(h2 + bh_ref[...], 0.0)
    # layer5: h2 @ W5 + b5
    out = jnp.dot(h2.astype(w5_ref.dtype), w5_ref[...],
                  preferred_element_type=jnp.float32) + b5_ref[...]
    o_ref[...] = out.astype(o_ref.dtype)


def exmlp_forward(x, params, stream_dtype=jnp.float32):
    """x: [B, S, input_size] float32.  params: dict of weights pre-transposed to
    (in, out) layout, biases shaped (1, out).  Returns [B, S, OUTPUT_SIZE] f32.

    stream_dtype: dtype used to stream x and the weights through the kernel
    (jnp.float32 or jnp.bfloat16); accumulation is always f32."""
    B, S, D_in = x.shape
    rows = B * S
    x2d = x.reshape(rows, D_in).astype(stream_dtype)

    w1 = params["w1"].astype(stream_dtype)   # (D_in, H)
    wh = params["wh"].astype(stream_dtype)   # (H, 32)
    w5 = params["w5"].astype(stream_dtype)   # (32, OUT)
    b1 = params["b1"].astype(jnp.float32)    # (1, H)
    bh = params["bh"].astype(jnp.float32)    # (1, 32)
    b5 = params["b5"].astype(jnp.float32)    # (1, OUT)

    H = w1.shape[1]
    D4 = wh.shape[1]
    OUT = w5.shape[1]

    tile_rows = min(TILE_ROWS_MAX, _round_up(rows, ROW_ALIGN))
    grid = (pl.cdiv(rows, tile_rows),)

    itemsize = jnp.dtype(stream_dtype).itemsize
    flops = 2 * rows * (D_in * H + H * D4 + D4 * OUT)
    bytes_accessed = (
        rows * D_in * itemsize                       # x read stream
        + rows * OUT * 4                             # output writeback (f32)
        + (D_in * H + H * D4 + D4 * OUT) * itemsize  # weights (read once)
        + (H + D4 + OUT) * 4                         # biases
    )

    out2d = pl.pallas_call(
        exmlp_kernel,
        out_shape=jax.ShapeDtypeStruct((rows, OUT), jnp.float32),
        grid=grid,
        in_specs=[
            pl.BlockSpec((tile_rows, D_in), lambda i: (i, 0)),  # x: streamed by rows
            pl.BlockSpec((D_in, H), lambda i: (0, 0)),          # w1: VMEM-resident
            pl.BlockSpec((1, H), lambda i: (0, 0)),             # b1
            pl.BlockSpec((H, D4), lambda i: (0, 0)),            # wh
            pl.BlockSpec((1, D4), lambda i: (0, 0)),            # bh
            pl.BlockSpec((D4, OUT), lambda i: (0, 0)),          # w5
            pl.BlockSpec((1, OUT), lambda i: (0, 0)),           # b5
        ],
        out_specs=pl.BlockSpec((tile_rows, OUT), lambda i: (i, 0)),
        compiler_params=pltpu.CompilerParams(
            dimension_semantics=("parallel",),   # rows are independent -> megacore
        ),
        cost_estimate=pl.CostEstimate(
            flops=int(flops), transcendentals=0, bytes_accessed=int(bytes_accessed)
        ),
    )(x2d, w1, b1, wh, bh, w5, b5)

    return out2d.reshape(B, S, OUT)


def init_params(key, input_size, hidden_size, output_size):
    """Deterministic parameter init matching the module's shapes.
    layer1.matrix: xavier-normal (input_size, hidden_size); biases zero;
    nn.Linear weights stored pre-transposed as (in, out)."""
    k1, k2, k3 = jax.random.split(key, 3)

    def xavier_normal(k, fan_in, fan_out):
        std = jnp.sqrt(2.0 / (fan_in + fan_out))
        return std * jax.random.normal(k, (fan_in, fan_out), dtype=jnp.float32)

    def linear_init(k, fan_in, fan_out):
        bound = 1.0 / jnp.sqrt(jnp.float32(fan_in))
        return jax.random.uniform(k, (fan_in, fan_out), jnp.float32, -bound, bound)

    return {
        "w1": xavier_normal(k1, input_size, hidden_size),
        "b1": jnp.zeros((1, hidden_size), jnp.float32),
        "wh": linear_init(k2, hidden_size, INPUT_4),
        "bh": jnp.zeros((1, INPUT_4), jnp.float32),
        "w5": linear_init(k3, INPUT_4, output_size),
        "b5": jnp.zeros((1, output_size), jnp.float32),
    }


def exmlp_reference(x, params, stream_dtype=jnp.float32):
    """Pure-JAX reference of the same forward pass (same casting discipline)."""
    cast = lambda a: a.astype(stream_dtype)
    h = jnp.dot(cast(x), cast(params["w1"]), preferred_element_type=jnp.float32)
    h = jnp.maximum(h + params["b1"], 0.0)
    h = jnp.dot(cast(h), cast(params["wh"]), preferred_element_type=jnp.float32)
    h = jnp.maximum(h + params["bh"], 0.0)
    out = jnp.dot(cast(h), cast(params["w5"]), preferred_element_type=jnp.float32)
    return out + params["b5"]


if __name__ == "__main__":
    key = jax.random.PRNGKey(0)
    kx, kp = jax.random.split(key)

    B, S, INPUT_SIZE = 2, 8, 16
    x = jax.random.normal(kx, (B, S, INPUT_SIZE), dtype=jnp.float32)
    params = init_params(kp, INPUT_SIZE, HIDDEN_SIZE, OUTPUT_SIZE)

    # f32 streaming path: exact match against the pure-JAX reference.
    out = jax.block_until_ready(exmlp_forward(x, params))
    ref = exmlp_reference(x, params)
    assert out.shape == (B, S, OUTPUT_SIZE)
    assert jnp.allclose(out, ref, atol=1e-5, rtol=1e-5)

    # bf16 streaming path (halves the dominant x read traffic; f32 accumulation).
    out_bf16 = jax.block_until_ready(
        exmlp_forward(x, params, stream_dtype=jnp.bfloat16))
    ref_bf16 = exmlp_reference(x, params, stream_dtype=jnp.bfloat16)
    assert out_bf16.shape == (B, S, OUTPUT_SIZE)
    assert jnp.allclose(out_bf16, ref_bf16, atol=5e-2, rtol=5e-2)

    print("KERNEL_OK")
</pallas_src>

<mosaic_0001>
module attributes {stable_mosaic.version = 11 : i64} {
  func.func @exmlp_kernel(%arg0: i32, %arg1: memref<16x16xf32, #tpu.memory_space<vmem>>, %arg2: memref<16x64xf32, #tpu.memory_space<vmem>>, %arg3: memref<1x64xf32, #tpu.memory_space<vmem>>, %arg4: memref<64x32xf32, #tpu.memory_space<vmem>>, %arg5: memref<1x32xf32, #tpu.memory_space<vmem>>, %arg6: memref<32x2xf32, #tpu.memory_space<vmem>>, %arg7: memref<1x2xf32, #tpu.memory_space<vmem>>, %arg8: memref<16x2xf32, #tpu.memory_space<vmem>>) attributes {dimension_semantics = [#tpu.dimension_semantics<parallel>], iteration_bounds = array<i64: 1>, scalar_prefetch = 0 : i64, scratch_operands = 0 : i64, tpu.core_type = #tpu.core_type<tc>, window_params = [{transform_indices = @transform_0, window_bounds = array<i64: 16, 16>}, {pipeline_mode = #tpu.pipeline_mode<synchronous>, transform_indices = @transform_1, window_bounds = array<i64: 16, 64>}, {pipeline_mode = #tpu.pipeline_mode<synchronous>, transform_indices = @transform_2, window_bounds = array<i64: 1, 64>}, {pipeline_mode = #tpu.pipeline_mode<synchronous>, transform_indices = @transform_3, window_bounds = array<i64: 64, 32>}, {pipeline_mode = #tpu.pipeline_mode<synchronous>, transform_indices = @transform_4, window_bounds = array<i64: 1, 32>}, {pipeline_mode = #tpu.pipeline_mode<synchronous>, transform_indices = @transform_5, window_bounds = array<i64: 32, 2>}, {pipeline_mode = #tpu.pipeline_mode<synchronous>, transform_indices = @transform_6, window_bounds = array<i64: 1, 2>}, {transform_indices = @transform_7, window_bounds = array<i64: 16, 2>}]} {
    %c0 = arith.constant 0 : index
    %c0_0 = arith.constant 0 : index
    %0 = vector.load %arg1[%c0, %c0_0] : memref<16x16xf32, #tpu.memory_space<vmem>>, vector<16x16xf32>
    %c0_1 = arith.constant 0 : index
    %c0_2 = arith.constant 0 : index
    %1 = vector.load %arg2[%c0_1, %c0_2] : memref<16x64xf32, #tpu.memory_space<vmem>>, vector<16x64xf32>
    %cst = arith.constant dense<0.000000e+00> : vector<16x64xf32>
    %2 = tpu.matmul %0, %1, %cst {dimension_numbers = #tpu.dot_dimension_numbers<[1], [0], [0], [1], [0, 0, 1, 1], [], []>} : vector<16x16xf32>, vector<16x64xf32>, vector<16x64xf32> -> vector<16x64xf32>
    %c0_3 = arith.constant 0 : index
    %c0_4 = arith.constant 0 : index
    %3 = vector.load %arg3[%c0_3, %c0_4] : memref<1x64xf32, #tpu.memory_space<vmem>>, vector<1x64xf32>
    %4 = vector.broadcast %3 : vector<1x64xf32> to vector<16x64xf32>
    %5 = arith.addf %2, %4 : vector<16x64xf32>
    %cst_5 = arith.constant 0.000000e+00 : f32
    %6 = vector.broadcast %cst_5 : f32 to vector<16x64xf32>
    %7 = arith.maximumf %5, %6 : vector<16x64xf32>
    %c0_6 = arith.constant 0 : index
    %c0_7 = arith.constant 0 : index
    %8 = vector.load %arg4[%c0_6, %c0_7] : memref<64x32xf32, #tpu.memory_space<vmem>>, vector<64x32xf32>
    %cst_8 = arith.constant dense<0.000000e+00> : vector<16x32xf32>
    %9 = tpu.matmul %7, %8, %cst_8 {dimension_numbers = #tpu.dot_dimension_numbers<[1], [0], [0], [1], [0, 0, 1, 1], [], []>} : vector<16x64xf32>, vector<64x32xf32>, vector<16x32xf32> -> vector<16x32xf32>
    %c0_9 = arith.constant 0 : index
    %c0_10 = arith.constant 0 : index
    %10 = vector.load %arg5[%c0_9, %c0_10] : memref<1x32xf32, #tpu.memory_space<vmem>>, vector<1x32xf32>
    %11 = vector.broadcast %10 : vector<1x32xf32> to vector<16x32xf32>
    %12 = arith.addf %9, %11 : vector<16x32xf32>
    %cst_11 = arith.constant 0.000000e+00 : f32
    %13 = vector.broadcast %cst_11 : f32 to vector<16x32xf32>
    %14 = arith.maximumf %12, %13 : vector<16x32xf32>
    %c0_12 = arith.constant 0 : index
    %c0_13 = arith.constant 0 : index
    %15 = vector.load %arg6[%c0_12, %c0_13] : memref<32x2xf32, #tpu.memory_space<vmem>>, vector<32x2xf32>
    %cst_14 = arith.constant dense<0.000000e+00> : vector<16x2xf32>
    %16 = tpu.matmul %14, %15, %cst_14 {dimension_numbers = #tpu.dot_dimension_numbers<[1], [0], [0], [1], [0, 0, 1, 1], [], []>} : vector<16x32xf32>, vector<32x2xf32>, vector<16x2xf32> -> vector<16x2xf32>
    %c0_15 = arith.constant 0 : index
    %c0_16 = arith.constant 0 : index
    %17 = vector.load %arg7[%c0_15, %c0_16] : memref<1x2xf32, #tpu.memory_space<vmem>>, vector<1x2xf32>
    %18 = vector.broadcast %17 : vector<1x2xf32> to vector<16x2xf32>
    %19 = arith.addf %16, %18 : vector<16x2xf32>
    %c0_17 = arith.constant 0 : index
    %c0_18 = arith.constant 0 : index
    %20 = vector.load %arg8[%c0_17, %c0_18] : memref<16x2xf32, #tpu.memory_space<vmem>>, vector<16x2xf32>
    tpu.vector_store %arg8[%c0_17, %c0_18], %19 {strides = array<i32>} : memref<16x2xf32, #tpu.memory_space<vmem>>, vector<16x2xf32>,
    return
  }
  func.func @transform_0(%arg0: i32) -> (i32, i32) {
    %c0_i32 = arith.constant 0 : i32
    %c0_i32_0 = arith.constant 0 : i32
    return %arg0, %c0_i32 : i32, i32
  }
  func.func @transform_1(%arg0: i32) -> (i32, i32) {
    %c0_i32 = arith.constant 0 : i32
    %c0_i32_0 = arith.constant 0 : i32
    %c0_i32_1 = arith.constant 0 : i32
    return %c0_i32, %c0_i32_0 : i32, i32
  }
  func.func @transform_2(%arg0: i32) -> (i32, i32) {
    %c0_i32 = arith.constant 0 : i32
    %c0_i32_0 = arith.constant 0 : i32
    %c0_i32_1 = arith.constant 0 : i32
    return %c0_i32, %c0_i32_0 : i32, i32
  }
  func.func @transform_3(%arg0: i32) -> (i32, i32) {
    %c0_i32 = arith.constant 0 : i32
    %c0_i32_0 = arith.constant 0 : i32
    %c0_i32_1 = arith.constant 0 : i32
    return %c0_i32, %c0_i32_0 : i32, i32
  }
  func.func @transform_4(%arg0: i32) -> (i32, i32) {
    %c0_i32 = arith.constant 0 : i32
    %c0_i32_0 = arith.constant 0 : i32
    %c0_i32_1 = arith.constant 0 : i32
    return %c0_i32, %c0_i32_0 : i32, i32
  }
  func.func @transform_5(%arg0: i32) -> (i32, i32) {
    %c0_i32 = arith.constant 0 : i32
    %c0_i32_0 = arith.constant 0 : i32
    %c0_i32_1 = arith.constant 0 : i32
    return %c0_i32, %c0_i32_0 : i32, i32
  }
  func.func @transform_6(%arg0: i32) -> (i32, i32) {
    %c0_i32 = arith.constant 0 : i32
    %c0_i32_0 = arith.constant 0 : i32
    %c0_i32_1 = arith.constant 0 : i32
    return %c0_i32, %c0_i32_0 : i32, i32
  }
  func.func @transform_7(%arg0: i32) -> (i32, i32) {
    %c0_i32 = arith.constant 0 : i32
    %c0_i32_0 = arith.constant 0 : i32
    return %arg0, %c0_i32 : i32, i32
  }
}

</mosaic_0001>

<llo_original>
// kernel: tpu_custom_call.1
$region0: #{tpu_custom_call.1}
  #allocation0 [shape = 'u32[]', space=smem, size = 0x4, offset = 0x4, fixed_abs, tag = 'smem constant byte address 0x4 - core index']
  #allocation1 [shape = 'u32[144,128]{1,0:T(1,128)}', space=vmem, size = 0x12000, scoped, tag = 'internal scratch']
  %s0 = inlined_call_operand.vmem [shape: f32[16,16], index: 0, kind: input, shape index: {}]
  %s1 = inlined_call_operand.vmem [shape: f32[16,64], index: 1, kind: input, shape index: {}]
  %s2 = inlined_call_operand.vmem [shape: f32[1,64], index: 2, kind: input, shape index: {}]
  %s3 = inlined_call_operand.vmem [shape: f32[64,32], index: 3, kind: input, shape index: {}]
  %s4 = inlined_call_operand.vmem [shape: f32[1,32], index: 4, kind: input, shape index: {}]
  %s5 = inlined_call_operand.vmem [shape: f32[32,2], index: 5, kind: input, shape index: {}]
  %s6 = inlined_call_operand.vmem [shape: f32[1,2], index: 6, kind: input, shape index: {}]
  %s7 = inlined_call_operand.vmem [shape: f32[16,2], index: 7, kind: output, shape index: {}]
  %s8 = sld [smem:[#allocation0]]
  $region38: #{tpu_custom_call.1} parent=0
    _
  %s10 = ssub.s32 1, %s8
  %s11 = scalar_select 0, %s10, %s8
  // Predicated region
  $region2: #{tpu_custom_call.1} parent=0 // pred_check
    _
  $region3: #{tpu_custom_call.1} parent=0 // pred_check_branch
    %13 = sbr.rel (0) target = $region5
  $region4: #{tpu_custom_call.1} parent=0 // pred_region
    _
  $region5: #{tpu_custom_call.1} parent=0 // pred_fallthru
    _
  // Predicated region
  $region6: #{tpu_custom_call.1} parent=0 // pred_check
    _
  $region7: #{tpu_custom_call.1} parent=0 // pred_check_branch
    %15 = sbr.rel (0) target = $region9
  $region8: #{tpu_custom_call.1} parent=0 // pred_region
    _
  $region9: #{tpu_custom_call.1} parent=0 // pred_fallthru
    _
  // Predicated region
  $region10: #{tpu_custom_call.1} parent=0 // pred_check
    _
  $region11: #{tpu_custom_call.1} parent=0 // pred_check_branch
    %17 = sbr.rel (0) target = $region13
  $region12: #{tpu_custom_call.1} parent=0 // pred_region
    _
  $region13: #{tpu_custom_call.1} parent=0 // pred_fallthru
    _
  // Predicated region
  $region14: #{tpu_custom_call.1} parent=0 // pred_check
    _
  $region15: #{tpu_custom_call.1} parent=0 // pred_check_branch
    %19 = sbr.rel (0) target = $region17
  $region16: #{tpu_custom_call.1} parent=0 // pred_region
    _
  $region17: #{tpu_custom_call.1} parent=0 // pred_fallthru
    _
  // Predicated region
  $region18: #{tpu_custom_call.1} parent=0 // pred_check
    _
  $region19: #{tpu_custom_call.1} parent=0 // pred_check_branch
    %21 = sbr.rel (0) target = $region21
  $region20: #{tpu_custom_call.1} parent=0 // pred_region
    _
  $region21: #{tpu_custom_call.1} parent=0 // pred_fallthru
    _
  // Predicated region
  $region22: #{tpu_custom_call.1} parent=0 // pred_check
    _
  $region23: #{tpu_custom_call.1} parent=0 // pred_check_branch
    %23 = sbr.rel (0) target = $region25
  $region24: #{tpu_custom_call.1} parent=0 // pred_region
    _
  $region25: #{tpu_custom_call.1} parent=0 // pred_fallthru
    _
  // Predicated region
  $region26: #{tpu_custom_call.1} parent=0 // pred_check
    _
  $region27: #{tpu_custom_call.1} parent=0 // pred_check_branch
    %25 = sbr.rel (0) target = $region29
  $region28: #{tpu_custom_call.1} parent=0 // pred_region
    _
  $region29: #{tpu_custom_call.1} parent=0 // pred_fallthru
    _
  %v26 = vld [vmem:[%s0] sm:$0xff]
  %v27 = vld [vmem:[%s0 + $0x8] sm:$0xff]
  %v28 = vld [vmem:[%s1] sm:$0xff]
  %v29 = vld [vmem:[%s1 + $0x8] sm:$0xff]
  %v30 = vld [vmem:[%s2] sm:$0x1]
  %v32 = vlaneseq
  %v33 = vshrl.u32 %v32, 7
  %v34 = vsub.s32 0, %v33
  %v35 = vrot.slane %v30, %v34
  %vm37 = vcmask 130048
  %v39 = vsel %vm37, %v26, 0
  %v42 = vsel %vm37, %v27, 0
  %44 = vmatprep.subr.mxu0 0.0
  %45 = vmatpush1.msra.mxu0 0.0
  %46 = vmatprep.subr.mxu0 0.0
  %47 = vmatpush1.msra.mxu0 0.0
  %48 = vmatprep.subr.mxu0 0.0
  %49 = vmatpush1.msra.mxu0 0.0
  %50 = vmatprep.subr.mxu0 0.0
  %51 = vmatpush1.msra.mxu0 0.0
  %52 = vmatprep.subr.mxu0 0.0
  %53 = vmatpush1.msra.mxu0 0.0
  %54 = vmatprep.subr.mxu0 0.0
  %55 = vmatpush1.msra.mxu0 0.0
  %56 = vmatprep.subr.mxu0 0.0
  %57 = vmatpush1.msra.mxu0 0.0
  %58 = vmatprep.subr.mxu0 0.0
  %59 = vmatpush1.msra.mxu0 0.0
  %60 = vmatprep.subr.mxu0 0.0
  %61 = vmatpush1.msra.mxu0 0.0
  %62 = vmatprep.subr.mxu0 0.0
  %63 = vmatpush1.msra.mxu0 0.0
  %64 = vmatprep.subr.mxu0 0.0
  %65 = vmatpush1.msra.mxu0 0.0
  %66 = vmatprep.subr.mxu0 0.0
  %67 = vmatpush1.msra.mxu0 0.0
  %68 = vmatprep.subr.mxu0 0.0
  %69 = vmatpush1.msra.mxu0 0.0
  %70 = vmatprep.subr.mxu0 0.0
  %71 = vmatpush1.msra.mxu0 0.0
  %72 = vmatprep.subr.mxu0 0.0
  %73 = vmatpush1.msra.mxu0 %v29
  %74 = vmatprep.subr.mxu0 0.0
  %75 = vmatpush1.msra.mxu0 %v28
  %76 = vmatprep.subr.mxu0 0.0
  %77 = vmatpush2.msra.mxu0 0.0
  %78 = vmatprep.subr.mxu0 0.0
  %79 = vmatpush2.msra.mxu0 0.0
  %80 = vmatprep.subr.mxu0 0.0
  %81 = vmatpush2.msra.mxu0 0.0
  %82 = vmatprep.subr.mxu0 0.0
  %83 = vmatpush2.msra.mxu0 0.0
  %84 = vmatprep.subr.mxu0 0.0
  %85 = vmatpush2.msra.mxu0 0.0
  %86 = vmatprep.subr.mxu0 0.0
  %87 = vmatpush2.msra.mxu0 0.0
  %88 = vmatprep.subr.mxu0 0.0
  %89 = vmatpush2.msra.mxu0 0.0
  %90 = vmatprep.subr.mxu0 0.0
  %91 = vmatpush2.msra.mxu0 0.0
  %92 = vmatprep.subr.mxu0 0.0
  %93 = vmatpush2.msra.mxu0 0.0
  %94 = vmatprep.subr.mxu0 0.0
  %95 = vmatpush2.msra.mxu0 0.0
  %96 = vmatprep.subr.mxu0 0.0
  %97 = vmatpush2.msra.mxu0 0.0
  %98 = vmatprep.subr.mxu0 0.0
  %99 = vmatpush2.msra.mxu0 0.0
  %100 = vmatprep.subr.mxu0 0.0
  %101 = vmatpush2.msra.mxu0 0.0
  %102 = vmatprep.subr.mxu0 0.0
  %103 = vmatpush2.msra.mxu0 0.0
  %104 = vmatprep.subr.mxu0 0.0
  %105 = vmatpush2.msra.mxu0 0.0
  %106 = vmatprep.subr.mxu0 0.0
  %107 = vmatpush2.msra.mxu0 0.0
  %108 = vmatprep.mubr.f32.mxu0 0.0
  %109 = vmatmul.mubr.f32.gmra.mxu0 %v39
  %v110 = vpop.f32.mrf.mxu0
  %v111 = vadd.f32 %v35, %v110
  %v112 = vpop.f32.mrf.mxu0
  %113 = vmatprep.mubr.f32.mxu0 0.0
  %114 = vmatmul.mubr.f32.gmra.mxu0 %v42
  %v115 = vpop.f32.mrf.mxu0
  %v116 = vadd.f32 %v35, %v115
  %v117 = vpop.f32.mrf.mxu0
  %118 = vdwg.mxu0
  %v119 = vmax.f32 %v111, 0.0
  %v120 = vmax.f32 %v116, 0.0
  %v121 = vld [vmem:[%s3] sm:$0xff]
  %v122 = vld [vmem:[%s3 + $0x8] sm:$0xff]
  %v123 = vld [vmem:[%s3 + $0x10] sm:$0xff]
  %v124 = vld [vmem:[%s3 + $0x18] sm:$0xff]
  %v125 = vld [vmem:[%s3 + $0x20] sm:$0xff]
  %v126 = vld [vmem:[%s3 + $0x28] sm:$0xff]
  %v127 = vld [vmem:[%s3 + $0x30] sm:$0xff]
  %v128 = vld [vmem:[%s3 + $0x38] sm:$0xff]
  %v129 = vld [vmem:[%s4] sm:$0x1]
  %v131 = vlaneseq
  %v132 = vshrl.u32 %v131, 7
  %v133 = vsub.s32 0, %v132
  %v134 = vrot.slane %v129, %v133
  %vm136 = vcmask 523264
  %v138 = vsel %vm136, %v119, 0
  %v141 = vsel %vm136, %v120, 0
  %143 = vmatprep.subr.mxu0 0.0
  %144 = vmatpush1.msra.mxu0 0.0
  %145 = vmatprep.subr.mxu0 0.0
  %146 = vmatpush1.msra.mxu0 0.0
  %147 = vmatprep.subr.mxu0 0.0
  %148 = vmatpush1.msra.mxu0 0.0
  %149 = vmatprep.subr.mxu0 0.0
  %150 = vmatpush1.msra.mxu0 0.0
  %151 = vmatprep.subr.mxu0 0.0
  %152 = vmatpush1.msra.mxu0 0.0
  %153 = vmatprep.subr.mxu0 0.0
  %154 = vmatpush1.msra.mxu0 0.0
  %155 = vmatprep.subr.mxu0 0.0
  %156 = vmatpush1.msra.mxu0 0.0
  %157 = vmatprep.subr.mxu0 0.0
  %158 = vmatpush1.msra.mxu0 0.0
  %159 = vmatprep.subr.mxu0 0.0
  %160 = vmatpush1.msra.mxu0 %v128
  %161 = vmatprep.subr.mxu0 0.0
  %162 = vmatpush1.msra.mxu0 %v127
  %163 = vmatprep.subr.mxu0 0.0
  %164 = vmatpush1.msra.mxu0 %v126
  %165 = vmatprep.subr.mxu0 0.0
  %166 = vmatpush1.msra.mxu0 %v125
  %167 = vmatprep.subr.mxu0 0.0
  %168 = vmatpush1.msra.mxu0 %v124
  %169 = vmatprep.subr.mxu0 0.0
  %170 = vmatpush1.msra.mxu0 %v123
  %171 = vmatprep.subr.mxu0 0.0
  %172 = vmatpush1.msra.mxu0 %v122
  %173 = vmatprep.subr.mxu0 0.0
  %174 = vmatpush1.msra.mxu0 %v121
  %175 = vmatprep.subr.mxu0 0.0
  %176 = vmatpush2.msra.mxu0 0.0
  %177 = vmatprep.subr.mxu0 0.0
  %178 = vmatpush2.msra.mxu0 0.0
  %179 = vmatprep.subr.mxu0 0.0
  %180 = vmatpush2.msra.mxu0 0.0
  %181 = vmatprep.subr.mxu0 0.0
  %182 = vmatpush2.msra.mxu0 0.0
  %183 = vmatprep.subr.mxu0 0.0
  %184 = vmatpush2.msra.mxu0 0.0
  %185 = vmatprep.subr.mxu0 0.0
  %186 = vmatpush2.msra.mxu0 0.0
  %187 = vmatprep.subr.mxu0 0.0
  %188 = vmatpush2.msra.mxu0 0.0
  %189 = vmatprep.subr.mxu0 0.0
  %190 = vmatpush2.msra.mxu0 0.0
  %191 = vmatprep.subr.mxu0 0.0
  %192 = vmatpush2.msra.mxu0 0.0
  %193 = vmatprep.subr.mxu0 0.0
  %194 = vmatpush2.msra.mxu0 0.0
  %195 = vmatprep.subr.mxu0 0.0
  %196 = vmatpush2.msra.mxu0 0.0
  %197 = vmatprep.subr.mxu0 0.0
  %198 = vmatpush2.msra.mxu0 0.0
  %199 = vmatprep.subr.mxu0 0.0
  %200 = vmatpush2.msra.mxu0 0.0
  %201 = vmatprep.subr.mxu0 0.0
  %202 = vmatpush2.msra.mxu0 0.0
  %203 = vmatprep.subr.mxu0 0.0
  %204 = vmatpush2.msra.mxu0 0.0
  %205 = vmatprep.subr.mxu0 0.0
  %206 = vmatpush2.msra.mxu0 0.0
  %207 = vmatprep.mubr.f32.mxu0 0.0
  %208 = vmatmul.mubr.f32.gmra.mxu0 %v138
  %v209 = vpop.f32.mrf.mxu0
  %v210 = vadd.f32 %v134, %v209
  %v211 = vpop.f32.mrf.mxu0
  %212 = vmatprep.mubr.f32.mxu0 0.0
  %213 = vmatmul.mubr.f32.gmra.mxu0 %v141
  %v214 = vpop.f32.mrf.mxu0
  %v215 = vadd.f32 %v134, %v214
  %v216 = vpop.f32.mrf.mxu0
  %217 = vdwg.mxu0
  %v218 = vmax.f32 %v210, 0.0
  %v219 = vmax.f32 %v215, 0.0
  %v220 = vld [vmem:[%s5] sm:$0xff]
  %v221 = vld [vmem:[%s5 + $0x8] sm:$0xff]
  %v222 = vld [vmem:[%s5 + $0x10] sm:$0xff]
  %v223 = vld [vmem:[%s5 + $0x18] sm:$0xff]
  %v224 = vld [vmem:[%s6] sm:$0x1]
  %v226 = vlaneseq
  %v227 = vshrl.u32 %v226, 7
  %v228 = vsub.s32 0, %v227
  %v229 = vrot.slane %v224, %v228
  %vm231 = vcmask 261120
  %v233 = vsel %vm231, %v218, 0
  %v236 = vsel %vm231, %v219, 0
  %238 = vmatprep.subr.mxu0 0.0
  %239 = vmatpush1.msra.mxu0 0.0
  %240 = vmatprep.subr.mxu0 0.0
  %241 = vmatpush1.msra.mxu0 0.0
  %242 = vmatprep.subr.mxu0 0.0
  %243 = vmatpush1.msra.mxu0 0.0
  %244 = vmatprep.subr.mxu0 0.0
  %245 = vmatpush1.msra.mxu0 0.0
  %246 = vmatprep.subr.mxu0 0.0
  %247 = vmatpush1.msra.mxu0 0.0
  %248 = vmatprep.subr.mxu0 0.0
  %249 = vmatpush1.msra.mxu0 0.0
  %250 = vmatprep.subr.mxu0 0.0
  %251 = vmatpush1.msra.mxu0 0.0
  %252 = vmatprep.subr.mxu0 0.0
  %253 = vmatpush1.msra.mxu0 0.0
  %254 = vmatprep.subr.mxu0 0.0
  %255 = vmatpush1.msra.mxu0 0.0
  %256 = vmatprep.subr.mxu0 0.0
  %257 = vmatpush1.msra.mxu0 0.0
  %258 = vmatprep.subr.mxu0 0.0
  %259 = vmatpush1.msra.mxu0 0.0
  %260 = vmatprep.subr.mxu0 0.0
  %261 = vmatpush1.msra.mxu0 0.0
  %262 = vmatprep.subr.mxu0 0.0
  %263 = vmatpush1.msra.mxu0 %v223
  %264 = vmatprep.subr.mxu0 0.0
  %265 = vmatpush1.msra.mxu0 %v222
  %266 = vmatprep.subr.mxu0 0.0
  %267 = vmatpush1.msra.mxu0 %v221
  %268 = vmatprep.subr.mxu0 0.0
  %269 = vmatpush1.msra.mxu0 %v220
  %270 = vmatprep.subr.mxu0 0.0
  %271 = vmatpush2.msra.mxu0 0.0
  %272 = vmatprep.subr.mxu0 0.0
  %273 = vmatpush2.msra.mxu0 0.0
  %274 = vmatprep.subr.mxu0 0.0
  %275 = vmatpush2.msra.mxu0 0.0
  %276 = vmatprep.subr.mxu0 0.0
  %277 = vmatpush2.msra.mxu0 0.0
  %278 = vmatprep.subr.mxu0 0.0
  %279 = vmatpush2.msra.mxu0 0.0
  %280 = vmatprep.subr.mxu0 0.0
  %281 = vmatpush2.msra.mxu0 0.0
  %282 = vmatprep.subr.mxu0 0.0
  %283 = vmatpush2.msra.mxu0 0.0
  %284 = vmatprep.subr.mxu0 0.0
  %285 = vmatpush2.msra.mxu0 0.0
  %286 = vmatprep.subr.mxu0 0.0
  %287 = vmatpush2.msra.mxu0 0.0
  %288 = vmatprep.subr.mxu0 0.0
  %289 = vmatpush2.msra.mxu0 0.0
  %290 = vmatprep.subr.mxu0 0.0
  %291 = vmatpush2.msra.mxu0 0.0
  %292 = vmatprep.subr.mxu0 0.0
  %293 = vmatpush2.msra.mxu0 0.0
  %294 = vmatprep.subr.mxu0 0.0
  %295 = vmatpush2.msra.mxu0 0.0
  %296 = vmatprep.subr.mxu0 0.0
  %297 = vmatpush2.msra.mxu0 0.0
  %298 = vmatprep.subr.mxu0 0.0
  %299 = vmatpush2.msra.mxu0 0.0
  %300 = vmatprep.subr.mxu0 0.0
  %301 = vmatpush2.msra.mxu0 0.0
  %302 = vmatprep.mubr.f32.mxu0 0.0
  %303 = vmatmul.mubr.f32.gmra.mxu0 %v233
  %v304 = vpop.f32.mrf.mxu0
  %v305 = vadd.f32 %v229, %v304
  %v306 = vpop.f32.mrf.mxu0
  %307 = vmatprep.mubr.f32.mxu0 0.0
  %308 = vmatmul.mubr.f32.gmra.mxu0 %v236
  %v309 = vpop.f32.mrf.mxu0
  %v310 = vadd.f32 %v229, %v309
  %v311 = vpop.f32.mrf.mxu0
  %312 = vdwg.mxu0
  %vm313 = vcmask 15360
  %314 = vst.msk [vmem:[%s7] sm:$0xff] %vm313, %v305
  %315 = vst.msk [vmem:[%s7 + $0x8] sm:$0xff] %vm313, %v310
  // Predicated region
  $region30: #{tpu_custom_call.1} parent=0 // pred_check
    _
  $region31: #{tpu_custom_call.1} parent=0 // pred_check_branch
    %317 = sbr.rel (0) target = $region33
  $region32: #{tpu_custom_call.1} parent=0 // pred_region
    _
  $region33: #{tpu_custom_call.1} parent=0 // pred_fallthru
    _
  // Predicated region
  $region34: #{tpu_custom_call.1} parent=0 // pred_check
    _
  $region35: #{tpu_custom_call.1} parent=0 // pred_check_branch
    %319 = sbr.rel (0) target = $region37
  $region36: #{tpu_custom_call.1} parent=0 // pred_region
    _
  $region37: #{tpu_custom_call.1} parent=0 // pred_fallthru
    _

</llo_original>
